<compile_context>
chip_gen: v7x
topology: tpu7x:2x2x1
jax: 0.10.0
libtpu: 0.0.40
codegen_flags: <defaults>
</compile_context>

<pallas_src>
import numpy as np
import jax
import jax.numpy as jnp
from jax.experimental import pallas as pl
from jax.experimental.pallas import tpu as pltpu


def _smooth_relu_kernel(x_ref, y_ref):
    # softplus(x) = -logsigmoid(-x); numerically stable, computed in f32.
    x = x_ref[...].astype(jnp.float32)
    y = jnp.maximum(x, 0.0) + jnp.log1p(jnp.exp(-jnp.abs(x)))
    y_ref[...] = y.astype(y_ref.dtype)


_LANE = 128                      # lane-dense last dim (exactly one vreg width)
_TARGET_BLOCK_BYTES = 4 << 20    # ~4 MiB per block (safe on v5e/v6e/v7x)
_MIN_SPLIT_BYTES = 1 << 20       # split >=1 MiB tensors into >=2 blocks (v7x 2 TCs)
_XLA_FALLBACK_ELEMS = 1024       # below this, XLA fused elementwise is optimal


def _choose_tile_rows(rows, itemsize):
    # Sublane multiple is dtype-aware: 8 for f32, 16 for bf16, 32 for int8/fp8.
    sub = max(8, 32 // itemsize)
    cap = max(sub, (_TARGET_BLOCK_BYTES // (_LANE * itemsize)) // sub * sub)
    if rows > cap:
        return cap
    if rows >= 2 * sub and rows * _LANE * itemsize >= _MIN_SPLIT_BYTES:
        # Keep >=2 grid steps so ("parallel",) can shard across both v7x TCs.
        half = -(-rows // 2)
        return -(-half // sub) * sub
    # One block covering the full rows dim (always a legal block shape).
    return rows


def _smooth_relu_2d(x2d):
    rows, lane = x2d.shape
    itemsize = jnp.dtype(x2d.dtype).itemsize
    tile_rows = _choose_tile_rows(rows, itemsize)
    grid = (pl.cdiv(rows, tile_rows),)
    n_proc = rows * lane
    return pl.pallas_call(
        _smooth_relu_kernel,
        out_shape=jax.ShapeDtypeStruct((rows, lane), x2d.dtype),
        grid_spec=pltpu.PrefetchScalarGridSpec(
            num_scalar_prefetch=0,
            grid=grid,
            in_specs=[pl.BlockSpec((tile_rows, lane), lambda i: (i, 0))],
            out_specs=pl.BlockSpec((tile_rows, lane), lambda i: (i, 0)),
        ),
        compiler_params=pltpu.CompilerParams(
            dimension_semantics=("parallel",),
            vmem_limit_bytes=32 * 1024 * 1024,
        ),
        cost_estimate=pl.CostEstimate(
            flops=4 * n_proc,
            transcendentals=2 * n_proc,
            bytes_accessed=2 * n_proc * itemsize,
        ),
    )(x2d)


def smooth_relu(x):
    """Pallas-backed SmoothReLU forward: y = -logsigmoid(-x) = softplus(x)."""
    orig_shape = x.shape
    n = x.size
    if n == 0:
        return x
    if n < _XLA_FALLBACK_ELEMS:
        # Tiny tensors: pallas_call launch + reshapes dominate; use XLA.
        return (-jax.nn.log_sigmoid(-x)).astype(x.dtype)

    if n % _LANE == 0:
        # Common case: free reshape to a lane-dense slab; no pad, no slice.
        y2d = _smooth_relu_2d(x.reshape(n // _LANE, _LANE))
        return y2d.reshape(orig_shape)

    # Ragged case (rare): pad only to the next lane multiple (< 128 elements).
    rows = pl.cdiv(n, _LANE)
    pad = rows * _LANE - n
    xf = jnp.pad(x.reshape(-1), (0, pad)).reshape(rows, _LANE)
    y2d = _smooth_relu_2d(xf)
    return y2d.reshape(-1)[:n].reshape(orig_shape)


if __name__ == "__main__":
    key = jax.random.PRNGKey(0)
    k1, k2, k3, k4, k5 = jax.random.split(key, 5)

    def ref_fn(v):
        return -jax.nn.log_sigmoid(-v.astype(jnp.float32))

    # 1) Small shape consistent with an elementwise activation module.
    x = jax.random.normal(k1, (2, 4, 16, 16), dtype=jnp.float32) * 3.0
    y = jax.block_until_ready(smooth_relu(x))
    np.testing.assert_allclose(np.asarray(y), np.asarray(ref_fn(x)),
                               rtol=1e-6, atol=1e-6)
    assert y.shape == x.shape and y.dtype == x.dtype

    # 2) 2-D shape, single-block path (n % 128 == 0, no pad/slice).
    x2 = jax.random.normal(k2, (8, 4096), dtype=jnp.float32)
    y2 = jax.block_until_ready(smooth_relu(x2))
    np.testing.assert_allclose(np.asarray(y2), np.asarray(ref_fn(x2)),
                               rtol=1e-6, atol=1e-6)

    # 3) bf16 end-to-end (bf16 in HBM, f32 math inside the kernel).
    x3 = jax.random.normal(k3, (4, 256), dtype=jnp.bfloat16)
    y3 = jax.block_until_ready(smooth_relu(x3))
    np.testing.assert_allclose(np.asarray(y3.astype(jnp.float32)),
                               np.asarray(ref_fn(x3)), rtol=1e-2, atol=1e-2)
    assert y3.dtype == jnp.bfloat16

    # 4) Ragged size (n % 128 != 0) -> minimal-pad path.
    x4 = jax.random.normal(k4, (7, 300), dtype=jnp.float32)
    y4 = jax.block_until_ready(smooth_relu(x4))
    np.testing.assert_allclose(np.asarray(y4), np.asarray(ref_fn(x4)),
                               rtol=1e-6, atol=1e-6)

    # 5) Multi-block grid with a partial (masked) last block.
    x5 = jax.random.normal(k5, (1024, 2304), dtype=jnp.float32)
    y5 = jax.block_until_ready(smooth_relu(x5))
    np.testing.assert_allclose(np.asarray(y5), np.asarray(ref_fn(x5)),
                               rtol=1e-6, atol=1e-6)

    print("KERNEL_OK")
</pallas_src>

<mosaic_0001>
module attributes {stable_mosaic.version = 11 : i64} {
  func.func @_smooth_relu_kernel(%arg0: i32, %arg1: memref<16x128xf32, #tpu.memory_space<vmem>>, %arg2: memref<16x128xf32, #tpu.memory_space<vmem>>) attributes {dimension_semantics = [#tpu.dimension_semantics<parallel>], iteration_bounds = array<i64: 1>, scalar_prefetch = 0 : i64, scratch_operands = 0 : i64, tpu.core_type = #tpu.core_type<tc>, window_params = [{transform_indices = @transform_0, window_bounds = array<i64: 16, 128>}, {transform_indices = @transform_1, window_bounds = array<i64: 16, 128>}]} {
    %c0 = arith.constant 0 : index
    %c0_0 = arith.constant 0 : index
    %0 = vector.load %arg1[%c0, %c0_0] : memref<16x128xf32, #tpu.memory_space<vmem>>, vector<16x128xf32>
    %cst = arith.constant 0.000000e+00 : f32
    %1 = vector.broadcast %cst : f32 to vector<16x128xf32>
    %2 = arith.maximumf %0, %1 : vector<16x128xf32>
    %3 = math.absf %0 : vector<16x128xf32>
    %cst_1 = arith.constant 0.000000e+00 : f32
    %4 = vector.broadcast %cst_1 : f32 to vector<16x128xf32>
    %5 = arith.subf %4, %3 : vector<16x128xf32>
    %6 = math.exp %5 : vector<16x128xf32>
    %7 = math.log1p %6 : vector<16x128xf32>
    %8 = arith.addf %2, %7 : vector<16x128xf32>
    %c0_2 = arith.constant 0 : index
    %c0_3 = arith.constant 0 : index
    %9 = vector.load %arg2[%c0_2, %c0_3] : memref<16x128xf32, #tpu.memory_space<vmem>>, vector<16x128xf32>
    tpu.vector_store %arg2[%c0_2, %c0_3], %8 {strides = array<i32>} : memref<16x128xf32, #tpu.memory_space<vmem>>, vector<16x128xf32>,
    return
  }
  func.func @transform_0(%arg0: i32) -> (i32, i32) {
    %c0_i32 = arith.constant 0 : i32
    %c0_i32_0 = arith.constant 0 : i32
    return %arg0, %c0_i32 : i32, i32
  }
  func.func @transform_1(%arg0: i32) -> (i32, i32) {
    %c0_i32 = arith.constant 0 : i32
    %c0_i32_0 = arith.constant 0 : i32
    return %arg0, %c0_i32 : i32, i32
  }
}

</mosaic_0001>

<llo_original>
// kernel: tpu_custom_call.1
$region0: #{tpu_custom_call.1}
  #allocation0 [shape = 'u32[]', space=smem, size = 0x4, offset = 0x4, fixed_abs, tag = 'smem constant byte address 0x4 - core index']
  #allocation1 [shape = 'u32[144,128]{1,0:T(1,128)}', space=vmem, size = 0x12000, scoped, tag = 'internal scratch']
  %s0 = inlined_call_operand.hbm [shape: f32[16,128], index: 0, kind: input, shape index: {}]
  %s1 = inlined_call_operand.hbm [shape: f32[16,128], index: 1, kind: output, shape index: {}]
  %s2 = sld [smem:[#allocation0]]
  $region18: #{tpu_custom_call.1} parent=0
    _
  %s4 = ssub.s32 1, %s2
  %s5 = scalar_select 0, %s4, %s2
  $region1: #{tpu_custom_call.1} parent=0
    #allocation2 [shape = 'u8[8192]{0}', space=vmem, size = 0x2000, scoped, tag = 'input window, operand 0, single buffered']
    #allocation3 [shape = 's32[1]{0}', space=sflag, size = 0x4, scoped, tag = 'scoped memory for tpu_custom_call.1']
    #allocation4 [shape = 's32[1]{0}', space=sflag, size = 0x4, scoped, tag = 'scoped memory for tpu_custom_call.1']
    #allocation5 [shape = 'u8[8192]{0}', space=vmem, size = 0x2000, scoped, tag = 'output window, operand 0, single buffered']
    %6 = vsyncpa [#allocation3], 0
    %7 = vsyncpa [#allocation4], 0
    // Predicated region
    $region2: #{tpu_custom_call.1} parent=1 // pred_check
      _
    $region3: #{tpu_custom_call.1} parent=1 // pred_check_branch
      %9 = sbr.rel (0) target = $region5
    $region4: #{tpu_custom_call.1} parent=1 // pred_region
      %s11 = ssub.s32 256, 256
      %12 = vsyncadd [#allocation3], %s11
      %s13 = sshll.u32 [#allocation2], 4
      %s14 = int_to_ptr.vmem [resolvable:$true] %s13
      %19 = dma.hbm_to_vmem [thread:$0]  %s0, 256, %s14, [#allocation3], 128, 128, 8
    $region5: #{tpu_custom_call.1} parent=1 // pred_fallthru
      _
    // Predicated region
    $region6: #{tpu_custom_call.1} parent=1 // pred_check
      _
    $region7: #{tpu_custom_call.1} parent=1 // pred_check_branch
      %21 = sbr.rel (0) target = $region9
    $region8: #{tpu_custom_call.1} parent=1 // pred_region
      %22 = dma.done [#allocation3], 256
    $region9: #{tpu_custom_call.1} parent=1 // pred_fallthru
      _
    %v23 = vld [vmem:[#allocation2] sm:$0xff]
    %v24 = vld [vmem:[#allocation2 + $0x8] sm:$0xff]
    %v25 = vmax.f32 %v23, 0.0
    %v26 = vmax.f32 %v24, 0.0
    %v27 = vand.u32 2147483647, %v23
    %v28 = vand.u32 2147483647, %v24
    %v29 = vsub.f32 0.0, %v27
    %v30 = vsub.f32 0.0, %v28
    %v31 = vmul.f32 %v29, 1.442695
    %v32 = vpow.pop %v31
    %v33 = vmul.f32 %v30, 1.442695
    %v34 = vpow.pop %v33
    %v35 = vadd.f32 %v32, 1.0
    %v36 = vlog2.pop %v35
    %v37 = vmul.f32 %v36, 0.6931472
    %v38 = vmul.f32 -0.5, %v32
    %v39 = vadd.f32 %v38, 1.0
    %v40 = vmul.f32 %v39, %v32
    %v41 = vand.u32 2147483647, %v32
    %vm42 = vcmp.lt.f32.partialorder %v41, 0.0004427343
    %v43 = vsel %vm42, %v40, %v37
    %v44 = vadd.f32 %v34, 1.0
    %v45 = vlog2.pop %v44
    %v46 = vmul.f32 %v45, 0.6931472
    %v47 = vmul.f32 -0.5, %v34
    %v48 = vadd.f32 %v47, 1.0
    %v49 = vmul.f32 %v48, %v34
    %v50 = vand.u32 2147483647, %v34
    %vm51 = vcmp.lt.f32.partialorder %v50, 0.0004427343
    %v52 = vsel %vm51, %v49, %v46
    %v53 = vadd.f32 %v25, %v43
    %v54 = vadd.f32 %v26, %v52
    %55 = vst [vmem:[#allocation5] sm:$0xff] %v53
    %56 = vst [vmem:[#allocation5 + $0x8] sm:$0xff] %v54
    // Predicated region
    $region10: #{tpu_custom_call.1} parent=1 // pred_check
      _
    $region11: #{tpu_custom_call.1} parent=1 // pred_check_branch
      %58 = sbr.rel (0) target = $region13
    $region12: #{tpu_custom_call.1} parent=1 // pred_region
      %s60 = ssub.s32 256, 256
      %61 = vsyncadd [#allocation4], %s60
      %s62 = sshll.u32 [#allocation5], 4
      %s63 = int_to_ptr.vmem [resolvable:$true] %s62
      %68 = dma.vmem_to_hbm [thread:$0]  %s63, 256, %s1, [#allocation4], 128, 128, 8
    $region13: #{tpu_custom_call.1} parent=1 // pred_fallthru
      _
    // Predicated region
    $region14: #{tpu_custom_call.1} parent=1 // pred_check
      _
    $region15: #{tpu_custom_call.1} parent=1 // pred_check_branch
      %70 = sbr.rel (0) target = $region17
    $region16: #{tpu_custom_call.1} parent=1 // pred_region
      %71 = dma.done [#allocation4], 256
    $region17: #{tpu_custom_call.1} parent=1 // pred_fallthru
      _
    %72 = vsyncpa [#allocation3], 1
    %73 = vsyncpa [#allocation4], 1

</llo_original>
